<compile_context>
chip_gen: v7x
topology: tpu7x:2x2x1
jax: 0.10.0
libtpu: 0.0.40
codegen_flags: <defaults>
</compile_context>

<pallas_src>
import functools
import math

import jax
import jax.numpy as jnp
from jax.experimental import pallas as pl
from jax.experimental.pallas import tpu as pltpu

LN_EPS = 1e-12  # HF Roberta layer_norm_eps default


@functools.lru_cache(maxsize=None)
def _vmem_limit_bytes():
    """Generation-aware scoped-VMEM budget."""
    try:
        kind = jax.devices()[0].device_kind.lower()
    except Exception:  # pragma: no cover
        return 64 * 1024 * 1024
    if "v7" in kind:                 # v7x: 64 MiB physical VMEM per TC
        return 48 * 1024 * 1024
    return 80 * 1024 * 1024          # v5e / v6e: 128 MiB physical


def _round_up(x, m):
    return ((x + m - 1) // m) * m


def _pick_tile(dim, candidates):
    """Largest candidate tile that divides `dim` (dim pre-rounded to min cand)."""
    for c in candidates:
        if dim % c == 0:
            return c
    return dim


# --------------------------- tiled linear (bias [+ gelu]) --------------------

def _linear_kernel(x_ref, w_ref, b_ref, o_ref, acc_ref, *, activation):
    k = pl.program_id(2)

    @pl.when(k == 0)
    def _init():
        acc_ref[...] = jnp.zeros_like(acc_ref)

    x = x_ref[...]
    if x_ref.dtype != jnp.bfloat16:          # bf16 inputs skip the VALU cast
        x = x.astype(jnp.bfloat16)
    acc_ref[...] += jnp.dot(x, w_ref[...], preferred_element_type=jnp.float32)

    @pl.when(k == pl.num_programs(2) - 1)
    def _finalize():
        acc = acc_ref[...] + b_ref[...]
        if activation == "gelu":             # exact (erf) gelu, as in HF "gelu"
            acc = 0.5 * acc * (1.0 + jax.lax.erf(acc * (1.0 / math.sqrt(2.0))))
        o_ref[...] = acc.astype(o_ref.dtype)


def linear(x, w, b, activation=None, out_dtype=jnp.float32):
    """x: (M, K), w: (K, N) bf16, b: (N,) f32 -> (M, N) out_dtype."""
    M, K = x.shape
    N = w.shape[1]
    Mp, Kp, Np = _round_up(M, 8), _round_up(K, 128), _round_up(N, 128)
    tm = _pick_tile(Mp, (512, 256, 128, 64, 32, 16, 8))
    tk = _pick_tile(Kp, (512, 384, 256, 128))
    tn = _pick_tile(Np, (2048, 1536, 1024, 768, 512, 384, 256, 128))
    if (Mp, Kp) != (M, K):
        x = jnp.pad(x, ((0, Mp - M), (0, Kp - K)))
    if (Kp, Np) != (K, N):
        w = jnp.pad(w, ((0, Kp - K), (0, Np - N)))
    if Np != N:
        b = jnp.pad(b, (0, Np - N))

    out = pl.pallas_call(
        functools.partial(_linear_kernel, activation=activation),
        out_shape=jax.ShapeDtypeStruct((Mp, Np), out_dtype),
        grid=(Mp // tm, Np // tn, Kp // tk),
        in_specs=[pl.BlockSpec((tm, tk), lambda i, j, k: (i, k)),
                  pl.BlockSpec((tk, tn), lambda i, j, k: (k, j)),
                  pl.BlockSpec((1, tn), lambda i, j, k: (0, j))],
        out_specs=pl.BlockSpec((tm, tn), lambda i, j, k: (i, j)),
        scratch_shapes=[pltpu.VMEM((tm, tn), jnp.float32)],
        compiler_params=pltpu.CompilerParams(
            dimension_semantics=("parallel", "parallel", "arbitrary"),
            vmem_limit_bytes=_vmem_limit_bytes()),
    )(x, w, b.reshape(1, Np))
    if (Mp, Np) != (M, N):
        out = out[:M, :N]
    return out


# --------------------- tiled linear + residual-add + layernorm ---------------

def _linear_add_ln_kernel(x_ref, w_ref, b_ref, r_ref, g_ref, bt_ref,
                          o_ref, acc_ref):
    k = pl.program_id(1)

    @pl.when(k == 0)
    def _init():
        acc_ref[...] = jnp.zeros_like(acc_ref)

    x = x_ref[...]
    if x_ref.dtype != jnp.bfloat16:
        x = x.astype(jnp.bfloat16)
    acc_ref[...] += jnp.dot(x, w_ref[...], preferred_element_type=jnp.float32)

    @pl.when(k == pl.num_programs(1) - 1)
    def _finalize():
        z = acc_ref[...] + b_ref[...] + r_ref[...].astype(jnp.float32)
        mu = jnp.mean(z, axis=-1, keepdims=True)
        zc = z - mu
        var = jnp.mean(zc * zc, axis=-1, keepdims=True)
        y = zc * jax.lax.rsqrt(var + LN_EPS)
        o_ref[...] = (y * g_ref[...] + bt_ref[...]).astype(o_ref.dtype)


def linear_add_ln(x, w, b, residual, gamma, beta):
    """LayerNorm(x @ w + b + residual) * gamma + beta.  N kept whole for LN."""
    M, K = x.shape
    N = w.shape[1]
    Mp, Kp = _round_up(M, 8), _round_up(K, 128)
    tm = _pick_tile(Mp, (512, 256, 128, 64, 32, 16, 8))
    tk = _pick_tile(Kp, (512, 384, 256, 128))
    if (Mp, Kp) != (M, K):
        x = jnp.pad(x, ((0, Mp - M), (0, Kp - K)))
    if Kp != K:
        w = jnp.pad(w, ((0, Kp - K), (0, 0)))
    if Mp != M:
        residual = jnp.pad(residual, ((0, Mp - M), (0, 0)))

    out = pl.pallas_call(
        _linear_add_ln_kernel,
        out_shape=jax.ShapeDtypeStruct((Mp, N), jnp.float32),
        grid=(Mp // tm, Kp // tk),
        in_specs=[pl.BlockSpec((tm, tk), lambda i, k: (i, k)),
                  pl.BlockSpec((tk, N), lambda i, k: (k, 0)),
                  pl.BlockSpec((1, N), lambda i, k: (0, 0)),
                  pl.BlockSpec((tm, N), lambda i, k: (i, 0)),
                  pl.BlockSpec((1, N), lambda i, k: (0, 0)),
                  pl.BlockSpec((1, N), lambda i, k: (0, 0))],
        out_specs=pl.BlockSpec((tm, N), lambda i, k: (i, 0)),
        scratch_shapes=[pltpu.VMEM((tm, N), jnp.float32)],
        compiler_params=pltpu.CompilerParams(
            dimension_semantics=("parallel", "arbitrary"),
            vmem_limit_bytes=_vmem_limit_bytes()),
    )(x, w, b.reshape(1, N), residual, gamma.reshape(1, N), beta.reshape(1, N))
    if Mp != M:
        out = out[:M]
    return out


# --------------------------- multi-head self attention -----------------------

def _mha_kernel(qrows_ref, kv_ref, bias_ref, o_ref, *, nh, dh, scale):
    H = nh * dh
    S = kv_ref.shape[1]
    tq = qrows_ref.shape[1]
    # Hoist the additive-mask broadcast (JAX does not CSE broadcast_in_dim).
    bias_b = jnp.broadcast_to(bias_ref[0], (tq, S))
    # Process heads in 128-lane-aligned groups; store each group directly.
    hpg = max(1, min(nh, 128 // max(dh, 1)))
    for g0 in range(0, nh, hpg):
        gsz = min(hpg, nh - g0)
        c0, c1 = g0 * dh, (g0 + gsz) * dh
        q_g = qrows_ref[0, :, c0:c1]                      # (tq, gsz*dh) bf16
        k_g = kv_ref[0, :, H + c0:H + c1]                 # (S, gsz*dh)  bf16
        v_g = kv_ref[0, :, 2 * H + c0:2 * H + c1]         # (S, gsz*dh)  bf16
        outs = []
        for hh in range(gsz):
            # scale folded into q (tq*dh mults instead of tq*S)
            q = q_g[:, hh * dh:(hh + 1) * dh] * scale
            k = k_g[:, hh * dh:(hh + 1) * dh]
            v = v_g[:, hh * dh:(hh + 1) * dh]
            s = jnp.dot(q, k.T, preferred_element_type=jnp.float32) + bias_b
            s = s - jnp.max(s, axis=-1, keepdims=True)
            p = jnp.exp(s)
            p = p * pl.reciprocal(jnp.sum(p, axis=-1, keepdims=True), approx=True)
            outs.append(jnp.dot(p.astype(jnp.bfloat16), v,
                                preferred_element_type=jnp.float32))
        blk = outs[0] if gsz == 1 else jnp.concatenate(outs, axis=-1)
        o_ref[0, :, c0:c1] = blk.astype(o_ref.dtype)


def mha(qkv_bsh, bias, nh):
    """qkv_bsh: (B, S, 3H) bf16 -> ctx (B, S, H) bf16."""
    B, S, H3 = qkv_bsh.shape
    H = H3 // 3
    dh = H // nh
    if S % 8 == 0:
        tq = _pick_tile(S, (512, 256, 128, 64, 32, 16, 8))
    else:
        tq = S
    nq = S // tq
    return pl.pallas_call(
        functools.partial(_mha_kernel, nh=nh, dh=dh, scale=1.0 / math.sqrt(dh)),
        out_shape=jax.ShapeDtypeStruct((B, S, H), jnp.bfloat16),
        grid=(B, nq),
        in_specs=[pl.BlockSpec((1, tq, H3), lambda b, qi: (b, qi, 0)),  # Q rows
                  pl.BlockSpec((1, S, H3), lambda b, qi: (b, 0, 0)),    # full K/V
                  pl.BlockSpec((1, 1, S), lambda b, qi: (b, 0, 0))],
        out_specs=pl.BlockSpec((1, tq, H), lambda b, qi: (b, qi, 0)),
        compiler_params=pltpu.CompilerParams(
            dimension_semantics=("parallel", "parallel"),
            vmem_limit_bytes=_vmem_limit_bytes()),
    )(qkv_bsh, qkv_bsh, bias)


# ------------------ fused TinyAttention adapters (all 4 at once) -------------

def _tiny_kernel(x_ref, wqkv_ref, bqkv_ref, wout_ref, bout_ref, bias_ref, o_ref,
                 *, n_adapters, ae, ah):
    dh = ae // ah
    scale = 1.0 / math.sqrt(dh)
    S = x_ref.shape[1]
    h = x_ref[0].astype(jnp.float32)          # (S, H) stays resident in VMEM
    bias_b = jnp.broadcast_to(bias_ref[0], (S, S))   # hoisted mask broadcast
    for a in range(n_adapters):
        qkv = jnp.dot(h.astype(jnp.bfloat16), wqkv_ref[a],
                      preferred_element_type=jnp.float32) + bqkv_ref[a]  # (S, 3ae)
        heads = []
        for hh in range(ah):
            q = qkv[:, hh * dh:(hh + 1) * dh] * scale        # scale folded in
            k = qkv[:, ae + hh * dh:ae + (hh + 1) * dh]
            v = qkv[:, 2 * ae + hh * dh:2 * ae + (hh + 1) * dh]
            if dh == 1:
                # degenerate head_dim==1: VPU outer product, skip the MXU
                s = q * k.T + bias_b
            else:
                s = jnp.dot(q, k.T, preferred_element_type=jnp.float32) + bias_b
            s = s - jnp.max(s, axis=-1, keepdims=True)
            p = jnp.exp(s)
            p = p * pl.reciprocal(jnp.sum(p, axis=-1, keepdims=True), approx=True)
            if dh == 1:
                # p @ v with N==1: broadcast-multiply + lane reduce on the VPU
                heads.append(jnp.sum(p * v[:, 0][None, :], axis=-1, keepdims=True))
            else:
                heads.append(jnp.dot(p, v, preferred_element_type=jnp.float32))
        ctx = heads[0] if ah == 1 else jnp.concatenate(heads, axis=-1)   # (S, ae)
        if ae <= 8:
            # ctx @ wout with tiny contracting dim: outer-product MAC on the VPU
            wout = wout_ref[a].astype(jnp.float32)                        # (ae, H)
            acc = ctx[:, 0:1] * wout[0:1, :]
            for j in range(1, ae):
                acc = acc + ctx[:, j:j + 1] * wout[j:j + 1, :]
            tiny = acc + bout_ref[a]
        else:
            tiny = jnp.dot(ctx.astype(jnp.bfloat16), wout_ref[a],
                           preferred_element_type=jnp.float32) + bout_ref[a]
        h = h + tiny * 0.25
    o_ref[0] = h.astype(o_ref.dtype)


def tiny_adapters(x_bsh, wqkv, bqkv, wout, bout, bias, ae, ah):
    # TODO(synk): batch-only grid; sequential adapter dependency prevents cheap
    #             query-tiling (each adapter's K/V needs the full updated h).
    B, S, H = x_bsh.shape
    n = wqkv.shape[0]
    return pl.pallas_call(
        functools.partial(_tiny_kernel, n_adapters=n, ae=ae, ah=ah),
        out_shape=jax.ShapeDtypeStruct((B, S, H), jnp.float32),
        grid=(B,),
        in_specs=[pl.BlockSpec((1, S, H), lambda b: (b, 0, 0)),
                  pl.BlockSpec((n, H, 3 * ae), lambda b: (0, 0, 0)),
                  pl.BlockSpec((n, 1, 3 * ae), lambda b: (0, 0, 0)),
                  pl.BlockSpec((n, ae, H), lambda b: (0, 0, 0)),
                  pl.BlockSpec((n, 1, H), lambda b: (0, 0, 0)),
                  pl.BlockSpec((1, 1, S), lambda b: (b, 0, 0))],
        out_specs=pl.BlockSpec((1, S, H), lambda b: (b, 0, 0)),
        compiler_params=pltpu.CompilerParams(
            dimension_semantics=("parallel",),
            vmem_limit_bytes=_vmem_limit_bytes()),
    )(x_bsh, wqkv, bqkv, wout, bout, bias)


# --------------------------- model glue --------------------------------------

def roberta_layer_forward(h_bsh, lp, attn_bias, tiny_bias, cfg):
    B, S, H = h_bsh.shape
    nh = cfg["num_heads"]
    ae, ah = cfg["attention_embd"], cfg["attention_head"]
    x2d = h_bsh.reshape(B * S, H)

    # --- RobertaAttention (fused QKV proj -> attention -> fused out+LN) ---
    qkv = linear(x2d, lp["wqkv"], lp["bqkv"], out_dtype=jnp.bfloat16)   # (B*S,3H) bf16
    ctx = mha(qkv.reshape(B, S, 3 * H), attn_bias, nh)                  # (B,S,H) bf16
    attn_out = linear_add_ln(ctx.reshape(B * S, H), lp["wo"], lp["bo"],
                             x2d, lp["ln1_g"], lp["ln1_b"])             # (B*S,H) f32

    # --- 4 x TinyAttention adapters, fused into one kernel ---
    attn_out = tiny_adapters(attn_out.reshape(B, S, H),
                             lp["tiny_wqkv"], lp["tiny_bqkv"],
                             lp["tiny_wout"], lp["tiny_bout"],
                             tiny_bias, ae, ah).reshape(B * S, H)

    # --- RobertaIntermediate + RobertaOutput (feed_forward_chunk) ---
    inter = linear(attn_out, lp["wi"], lp["bi"], activation="gelu",
                   out_dtype=jnp.bfloat16)                              # (B*S,I) bf16
    out = linear_add_ln(inter, lp["wo2"], lp["bo2"],
                        attn_out, lp["ln2_g"], lp["ln2_b"])
    return out.reshape(B, S, H)


def roberta_encoder_ada_forward(hidden_states, layers, attention_mask,
                                old_attention_mask, cfg):
    # HF-style extended additive masks: 0 where attend, -10000 where padded.
    attn_bias = ((1.0 - attention_mask) * -10000.0)[:, None, :].astype(jnp.float32)
    tiny_bias = ((1.0 - old_attention_mask) * -10000.0)[:, None, :].astype(jnp.float32)
    h = hidden_states
    for lp in layers:
        h = roberta_layer_forward(h, lp, attn_bias, tiny_bias, cfg)
    return h  # BaseModelOutput.last_hidden_state


# --------------------------- parameters --------------------------------------

def init_params(key, cfg):
    H, I, ae = cfg["hidden"], cfg["intermediate"], cfg["attention_embd"]

    def w(k, shape, scale=0.02):
        return jax.random.normal(k, shape, jnp.float32) * scale

    layers = []
    for _ in range(cfg["num_layers"]):
        key, kq, kk, kv, ko, kbq, kbk, kbv, kbo, ki, kbi, ko2, kbo2 = \
            jax.random.split(key, 13)
        lp = {
            "wq": w(kq, (H, H)), "bq": w(kbq, (H,)),
            "wk": w(kk, (H, H)), "bk": w(kbk, (H,)),
            "wv": w(kv, (H, H)), "bv": w(kbv, (H,)),
            "wo": w(ko, (H, H)), "bo": w(kbo, (H,)),
            "ln1_g": jnp.ones((H,), jnp.float32),
            "ln1_b": jnp.zeros((H,), jnp.float32),
            "wi": w(ki, (H, I)), "bi": w(kbi, (I,)),
            "wo2": w(ko2, (I, H)), "bo2": w(kbo2, (H,)),
            "ln2_g": jnp.ones((H,), jnp.float32),
            "ln2_b": jnp.zeros((H,), jnp.float32),
            "tiny": [],
        }
        for _ in range(4):
            key, k1, k2, k3, k4 = jax.random.split(key, 5)
            lp["tiny"].append({
                "wqkv": w(k1, (H, 3 * ae)), "bqkv": w(k2, (3 * ae,)),
                "wout": w(k3, (ae, H)), "bout": w(k4, (H,)),
            })
        layers.append(lp)
    return {"layers": layers}


def prepare_params(params, cfg):
    """Fuse QKV weights, stack tiny adapters, cast matmul weights to bf16."""
    prepared = []
    for lp in params["layers"]:
        prepared.append(dict(
            wqkv=jnp.concatenate([lp["wq"], lp["wk"], lp["wv"]],
                                 axis=1).astype(jnp.bfloat16),
            bqkv=jnp.concatenate([lp["bq"], lp["bk"], lp["bv"]], axis=0),
            wo=lp["wo"].astype(jnp.bfloat16), bo=lp["bo"],
            ln1_g=lp["ln1_g"], ln1_b=lp["ln1_b"],
            wi=lp["wi"].astype(jnp.bfloat16), bi=lp["bi"],
            wo2=lp["wo2"].astype(jnp.bfloat16), bo2=lp["bo2"],
            ln2_g=lp["ln2_g"], ln2_b=lp["ln2_b"],
            tiny_wqkv=jnp.stack([t["wqkv"] for t in lp["tiny"]]).astype(jnp.bfloat16),
            tiny_bqkv=jnp.stack([t["bqkv"] for t in lp["tiny"]])[:, None, :],
            tiny_wout=jnp.stack([t["wout"] for t in lp["tiny"]]).astype(jnp.bfloat16),
            tiny_bout=jnp.stack([t["bout"] for t in lp["tiny"]])[:, None, :],
        ))
    return prepared


# --------------------------- pure-JAX reference -------------------------------

def ref_forward(hidden_states, layers, attention_mask, old_attention_mask, cfg):
    nh = cfg["num_heads"]
    ae, ah = cfg["attention_embd"], cfg["attention_head"]
    H = cfg["hidden"]
    dh = H // nh
    dh_t = ae // ah
    scale = 1.0 / math.sqrt(dh)
    scale_t = 1.0 / math.sqrt(dh_t)

    def mm(x, w_bf16):  # bf16-input / f32-accumulate matmul, as in the kernels
        return jnp.dot(x.astype(jnp.bfloat16), w_bf16,
                       preferred_element_type=jnp.float32)

    def gelu(y):
        return 0.5 * y * (1.0 + jax.lax.erf(y * (1.0 / math.sqrt(2.0))))

    def add_ln(z, g, b):
        mu = z.mean(-1, keepdims=True)
        zc = z - mu
        var = (zc * zc).mean(-1, keepdims=True)
        return zc * jax.lax.rsqrt(var + LN_EPS) * g + b

    attn_bias = ((1.0 - attention_mask) * -10000.0)[:, None, :]
    tiny_bias = ((1.0 - old_attention_mask) * -10000.0)[:, None, :]
    h = hidden_states
    B, S, _ = h.shape
    for lp in layers:
        x = h.reshape(B * S, H)
        qkv = (mm(x, lp["wqkv"]) + lp["bqkv"]).astype(jnp.bfloat16)
        qkv = qkv.reshape(B, S, 3 * H)
        outs = []
        for hh in range(nh):
            q = qkv[..., hh * dh:(hh + 1) * dh] * scale
            k = qkv[..., H + hh * dh:H + (hh + 1) * dh]
            v = qkv[..., 2 * H + hh * dh:2 * H + (hh + 1) * dh]
            s = jnp.einsum("bqd,bkd->bqk", q, k,
                           preferred_element_type=jnp.float32) + attn_bias
            s = s - s.max(-1, keepdims=True)
            p = jnp.exp(s)
            p = p / p.sum(-1, keepdims=True)
            outs.append(jnp.einsum("bqk,bkd->bqd", p.astype(jnp.bfloat16), v,
                                   preferred_element_type=jnp.float32))
        ctx = jnp.concatenate(outs, -1).astype(jnp.bfloat16).reshape(B * S, H)
        attn_out = add_ln(mm(ctx, lp["wo"]) + lp["bo"] + x,
                          lp["ln1_g"], lp["ln1_b"])

        a3 = attn_out.reshape(B, S, H)
        for ai in range(lp["tiny_wqkv"].shape[0]):
            tqkv = mm(a3, lp["tiny_wqkv"][ai]) + lp["tiny_bqkv"][ai]
            heads = []
            for hh in range(ah):
                q = tqkv[..., hh * dh_t:(hh + 1) * dh_t] * scale_t
                k = tqkv[..., ae + hh * dh_t:ae + (hh + 1) * dh_t]
                v = tqkv[..., 2 * ae + hh * dh_t:2 * ae + (hh + 1) * dh_t]
                s = jnp.einsum("bqd,bkd->bqk", q, k) + tiny_bias
                s = s - s.max(-1, keepdims=True)
                p = jnp.exp(s)
                p = p / p.sum(-1, keepdims=True)
                heads.append(jnp.einsum("bqk,bkd->bqd", p, v))
            tctx = jnp.concatenate(heads, -1)
            tiny = jnp.einsum("bsa,ah->bsh", tctx,
                              lp["tiny_wout"][ai].astype(jnp.float32)) \
                + lp["tiny_bout"][ai]
            a3 = a3 + tiny * 0.25
        attn_out = a3.reshape(B * S, H)

        inter = gelu(mm(attn_out, lp["wi"]) + lp["bi"]).astype(jnp.bfloat16)
        ffn = mm(inter, lp["wo2"]) + lp["bo2"]
        h = add_ln(ffn + attn_out, lp["ln2_g"], lp["ln2_b"]).reshape(B, S, H)
    return h


# --------------------------- main ---------------------------------------------

if __name__ == "__main__":
    B, S = 2, 8
    cfg = dict(hidden=32, num_heads=4, intermediate=64, num_layers=2,
               attention_embd=1, attention_head=1)

    key = jax.random.PRNGKey(0)
    k_h, k_p = jax.random.split(key)
    hidden_states = jax.random.normal(k_h, (B, S, cfg["hidden"]), jnp.float32)
    raw_params = init_params(k_p, cfg)
    layers = prepare_params(raw_params, cfg)

    # masks: 1 = attend, 0 = padded (pad the last 2 tokens of example 1)
    attention_mask = jnp.ones((B, S), jnp.float32).at[1, 6:].set(0.0)
    old_attention_mask = jnp.ones((B, S), jnp.float32).at[1, 6:].set(0.0)

    out = roberta_encoder_ada_forward(hidden_states, layers, attention_mask,
                                      old_attention_mask, cfg)
    out = jax.block_until_ready(out)

    ref = ref_forward(hidden_states, layers, attention_mask,
                      old_attention_mask, cfg)
    assert out.shape == (B, S, cfg["hidden"])
    assert bool(jnp.all(jnp.isfinite(out)))
    max_err = float(jnp.max(jnp.abs(out - ref)))
    assert max_err < 2e-2, f"max abs err {max_err}"
    print("KERNEL_OK")
</pallas_src>

<mosaic_0001>
module attributes {stable_mosaic.version = 11 : i64} {
  func.func @_linear_kernel(%arg0: i32, %arg1: i32, %arg2: i32, %arg3: memref<16x128xf32, #tpu.memory_space<vmem>>, %arg4: memref<128x128xbf16, #tpu.memory_space<vmem>>, %arg5: memref<1x128xf32, #tpu.memory_space<vmem>>, %arg6: memref<16x128xbf16, #tpu.memory_space<vmem>>, %arg7: memref<16x128xf32, #tpu.memory_space<vmem>>) attributes {dimension_semantics = [#tpu.dimension_semantics<parallel>, #tpu.dimension_semantics<parallel>, #tpu.dimension_semantics<arbitrary>], iteration_bounds = array<i64: 1, 1, 1>, scalar_prefetch = 0 : i64, scratch_operands = 1 : i64, tpu.core_type = #tpu.core_type<tc>, window_params = [{transform_indices = @transform_0, window_bounds = array<i64: 16, 128>}, {transform_indices = @transform_1, window_bounds = array<i64: 128, 128>}, {transform_indices = @transform_2, window_bounds = array<i64: 1, 128>}, {transform_indices = @transform_3, window_bounds = array<i64: 16, 128>}]} {
    %c0_i32 = arith.constant 0 : i32
    %0 = arith.cmpi eq, %arg2, %c0_i32 : i32
    %1 = arith.extui %0 : i1 to i32
    %c0_i32_0 = arith.constant 0 : i32
    %2 = arith.cmpi ne, %1, %c0_i32_0 : i32
    scf.if %2 {
      %cst_10 = arith.constant 0.000000e+00 : f32
      %13 = vector.broadcast %cst_10 : f32 to vector<16x128xf32>
      %c0_11 = arith.constant 0 : index
      %c0_12 = arith.constant 0 : index
      %14 = vector.load %arg7[%c0_11, %c0_12] : memref<16x128xf32, #tpu.memory_space<vmem>>, vector<16x128xf32>
      tpu.vector_store %arg7[%c0_11, %c0_12], %13 {strides = array<i32>} : memref<16x128xf32, #tpu.memory_space<vmem>>, vector<16x128xf32>,
    } else {
    }
    %c0 = arith.constant 0 : index
    %c0_1 = arith.constant 0 : index
    %3 = vector.load %arg3[%c0, %c0_1] : memref<16x128xf32, #tpu.memory_space<vmem>>, vector<16x128xf32>
    %4 = arith.truncf %3 : vector<16x128xf32> to vector<16x128xbf16>
    %c0_2 = arith.constant 0 : index
    %c0_3 = arith.constant 0 : index
    %5 = vector.load %arg7[%c0_2, %c0_3] : memref<16x128xf32, #tpu.memory_space<vmem>>, vector<16x128xf32>
    %c0_4 = arith.constant 0 : index
    %c0_5 = arith.constant 0 : index
    %6 = vector.load %arg4[%c0_4, %c0_5] : memref<128x128xbf16, #tpu.memory_space<vmem>>, vector<128x128xbf16>
    %cst = arith.constant dense<0.000000e+00> : vector<16x128xf32>
    %7 = tpu.matmul %4, %6, %cst {dimension_numbers = #tpu.dot_dimension_numbers<[1], [0], [0], [1], [0, 0, 1, 1], [], []>} : vector<16x128xbf16>, vector<128x128xbf16>, vector<16x128xf32> -> vector<16x128xf32>
    %8 = arith.addf %5, %7 : vector<16x128xf32>
    %c0_6 = arith.constant 0 : index
    %c0_7 = arith.constant 0 : index
    %9 = vector.load %arg7[%c0_6, %c0_7] : memref<16x128xf32, #tpu.memory_space<vmem>>, vector<16x128xf32>
    tpu.vector_store %arg7[%c0_6, %c0_7], %8 {strides = array<i32>} : memref<16x128xf32, #tpu.memory_space<vmem>>, vector<16x128xf32>,
    %c0_i32_8 = arith.constant 0 : i32
    %10 = arith.cmpi eq, %arg2, %c0_i32_8 : i32
    %11 = arith.extui %10 : i1 to i32
    %c0_i32_9 = arith.constant 0 : i32
    %12 = arith.cmpi ne, %11, %c0_i32_9 : i32
    scf.if %12 {
      %c0_10 = arith.constant 0 : index
      %c0_11 = arith.constant 0 : index
      %13 = vector.load %arg7[%c0_10, %c0_11] : memref<16x128xf32, #tpu.memory_space<vmem>>, vector<16x128xf32>
      %c0_12 = arith.constant 0 : index
      %c0_13 = arith.constant 0 : index
      %14 = vector.load %arg5[%c0_12, %c0_13] : memref<1x128xf32, #tpu.memory_space<vmem>>, vector<1x128xf32>
      %15 = vector.broadcast %14 : vector<1x128xf32> to vector<16x128xf32>
      %16 = arith.addf %13, %15 : vector<16x128xf32>
      %17 = arith.truncf %16 : vector<16x128xf32> to vector<16x128xbf16>
      %c0_14 = arith.constant 0 : index
      %c0_15 = arith.constant 0 : index
      %18 = vector.load %arg6[%c0_14, %c0_15] : memref<16x128xbf16, #tpu.memory_space<vmem>>, vector<16x128xbf16>
      tpu.vector_store %arg6[%c0_14, %c0_15], %17 {strides = array<i32>} : memref<16x128xbf16, #tpu.memory_space<vmem>>, vector<16x128xbf16>,
    } else {
    }
    return
  }
  func.func @transform_0(%arg0: i32, %arg1: i32, %arg2: i32) -> (i32, i32) {
    %c0_i32 = arith.constant 0 : i32
    return %arg0, %arg2 : i32, i32
  }
  func.func @transform_1(%arg0: i32, %arg1: i32, %arg2: i32) -> (i32, i32) {
    %c0_i32 = arith.constant 0 : i32
    return %arg2, %arg1 : i32, i32
  }
  func.func @transform_2(%arg0: i32, %arg1: i32, %arg2: i32) -> (i32, i32) {
    %c0_i32 = arith.constant 0 : i32
    %c0_i32_0 = arith.constant 0 : i32
    return %c0_i32, %arg1 : i32, i32
  }
  func.func @transform_3(%arg0: i32, %arg1: i32, %arg2: i32) -> (i32, i32) {
    %c0_i32 = arith.constant 0 : i32
    return %arg0, %arg1 : i32, i32
  }
}

</mosaic_0001>

<llo_original>
// kernel: tpu_custom_call.1
$region0: #{tpu_custom_call.1}
  #allocation0 [shape = 'u32[]', space=smem, size = 0x4, offset = 0x4, fixed_abs, tag = 'smem constant byte address 0x4 - core index']
  #allocation1 [shape = 'u32[144,128]{1,0:T(1,128)}', space=vmem, size = 0x12000, scoped, tag = 'internal scratch']
  #allocation2 [shape = 'f32[16,128]{1,0:T(8,128)}', space=vmem, size = 0x2000, scoped, tag = 'scratch operand']
  %s0 = inlined_call_operand.hbm [shape: f32[16,128], index: 0, kind: input, shape index: {}]
  %s1 = inlined_call_operand.hbm [shape: bf16[128,128], index: 1, kind: input, shape index: {}]
  %s2 = inlined_call_operand.hbm [shape: f32[1,128], index: 2, kind: input, shape index: {}]
  %s3 = inlined_call_operand.hbm [shape: bf16[16,128], index: 3, kind: output, shape index: {}]
  %s4 = sld [smem:[#allocation0]]
  $region42: #{tpu_custom_call.1} parent=0
    _
  %s6 = ssub.s32 1, %s4
  %s7 = scalar_select 0, %s6, %s4
  $region1: #{tpu_custom_call.1} parent=0
    #allocation3 [shape = 'u8[8192]{0}', space=vmem, size = 0x2000, scoped, tag = 'input window, operand 0, single buffered']
    #allocation4 [shape = 's32[1]{0}', space=sflag, size = 0x4, scoped, tag = 'scoped memory for tpu_custom_call.1']
    #allocation5 [shape = 's32[1]{0}', space=sflag, size = 0x4, scoped, tag = 'scoped memory for tpu_custom_call.1']
    #allocation6 [shape = 'u8[32768]{0}', space=vmem, size = 0x8000, scoped, tag = 'input window, operand 1, single buffered']
    #allocation7 [shape = 's32[1]{0}', space=sflag, size = 0x4, scoped, tag = 'scoped memory for tpu_custom_call.1']
    #allocation8 [shape = 'u8[512]{0}', space=vmem, size = 0x400, scoped, tag = 'input window, operand 2, single buffered']
    #allocation9 [shape = 'u8[4096]{0}', space=vmem, size = 0x1000, scoped, tag = 'output window, operand 0, single buffered']
    %8 = vsyncpa [#allocation4], 0
    %9 = vsyncpa [#allocation7], 0
    %10 = vsyncpa [#allocation5], 0
    // Predicated region
    $region2: #{tpu_custom_call.1} parent=1 // pred_check
      _
    $region3: #{tpu_custom_call.1} parent=1 // pred_check_branch
      %12 = sbr.rel (0) target = $region5
    $region4: #{tpu_custom_call.1} parent=1 // pred_region
      %s14 = ssub.s32 256, 256
      %15 = vsyncadd [#allocation4], %s14
      %s16 = sshll.u32 [#allocation3], 4
      %s17 = int_to_ptr.vmem [resolvable:$true] %s16
      %22 = dma.hbm_to_vmem [thread:$0]  %s0, 256, %s17, [#allocation4], 128, 128, 8
    $region5: #{tpu_custom_call.1} parent=1 // pred_fallthru
      _
    // Predicated region
    $region6: #{tpu_custom_call.1} parent=1 // pred_check
      _
    $region7: #{tpu_custom_call.1} parent=1 // pred_check_branch
      %24 = sbr.rel (0) target = $region9
    $region8: #{tpu_custom_call.1} parent=1 // pred_region
      %s26 = ssub.s32 1024, 1024
      %27 = vsyncadd [#allocation7], %s26
      %s28 = sshll.u32 [#allocation6], 4
      %s29 = int_to_ptr.vmem [resolvable:$true] %s28
      %34 = dma.hbm_to_vmem [thread:$0]  %s1, 1024, %s29, [#allocation7], 64, 64, 4
    $region9: #{tpu_custom_call.1} parent=1 // pred_fallthru
      _
    // Predicated region
    $region10: #{tpu_custom_call.1} parent=1 // pred_check
      _
    $region11: #{tpu_custom_call.1} parent=1 // pred_check_branch
      %36 = sbr.rel (0) target = $region13
    $region12: #{tpu_custom_call.1} parent=1 // pred_region
      %s38 = ssub.s32 16, 16
      %39 = vsyncadd [#allocation7], %s38
      %s41 = sshll.u32 [#allocation8], 4
      %s42 = int_to_ptr.vmem [resolvable:$true] %s41
      %44 = dma.hbm_to_vmem [thread:$0]  %s2, 16, %s42, [#allocation7]
    $region13: #{tpu_custom_call.1} parent=1 // pred_fallthru
      _
    // Predicated region
    $region14: #{tpu_custom_call.1} parent=1 // pred_check
      _
    $region15: #{tpu_custom_call.1} parent=1 // pred_check_branch
      %46 = sbr.rel (0) target = $region17
    $region16: #{tpu_custom_call.1} parent=1 // pred_region
      %47 = dma.done [#allocation4], 256
    $region17: #{tpu_custom_call.1} parent=1 // pred_fallthru
      _
    // Predicated region
    $region18: #{tpu_custom_call.1} parent=1 // pred_check
      _
    $region19: #{tpu_custom_call.1} parent=1 // pred_check_branch
      %49 = sbr.rel (0) target = $region21
    $region20: #{tpu_custom_call.1} parent=1 // pred_region
      %50 = dma.done [#allocation7], 1024
    $region21: #{tpu_custom_call.1} parent=1 // pred_fallthru
      _
    // Predicated region
    $region22: #{tpu_custom_call.1} parent=1 // pred_check
      _
    $region23: #{tpu_custom_call.1} parent=1 // pred_check_branch
      %52 = sbr.rel (0) target = $region25
    $region24: #{tpu_custom_call.1} parent=1 // pred_region
      %53 = dma.done [#allocation7], 16
    $region25: #{tpu_custom_call.1} parent=1 // pred_fallthru
      _
    %p55 = scmp.eq.s32.totalorder 0, 0
    // Predicated region
    $region26: #{tpu_custom_call.1} parent=1 // pred_check
      %p56 = pneg %p55
    $region27: #{tpu_custom_call.1} parent=1 // pred_check_branch
      %58 = sbr.rel (%p56) target = $region29
    $region28: #{tpu_custom_call.1} parent=1 // pred_region
      %59 = vst [vmem:[#allocation2] sm:$0xff] 0.0
      %60 = vst [vmem:[#allocation2 + $0x8] sm:$0xff] 0.0
    $region29: #{tpu_custom_call.1} parent=1 // pred_fallthru
      _
    %v61 = vld [vmem:[#allocation3] sm:$0xff]
    %v62 = vld [vmem:[#allocation3 + $0x8] sm:$0xff]
    %v63 = vpack.c.bf16 %v62, %v61
    %v64 = vld [vmem:[#allocation2] sm:$0xff]
    %v65 = vld [vmem:[#allocation2 + $0x8] sm:$0xff]
    %v66 = vld [vmem:[#allocation6] sm:$0xf]
    %v67 = vld [vmem:[#allocation6 + $0x4] sm:$0xf]
    %v68 = vld [vmem:[#allocation6 + $0x8] sm:$0xf]
    %v69 = vld [vmem:[#allocation6 + $0xc] sm:$0xf]
    %v70 = vld [vmem:[#allocation6 + $0x10] sm:$0xf]
    %v71 = vld [vmem:[#allocation6 + $0x14] sm:$0xf]
    %v72 = vld [vmem:[#allocation6 + $0x18] sm:$0xf]
    %v73 = vld [vmem:[#allocation6 + $0x1c] sm:$0xf]
    %v74 = vld [vmem:[#allocation6 + $0x20] sm:$0xf]
    %v75 = vld [vmem:[#allocation6 + $0x24] sm:$0xf]
    %v76 = vld [vmem:[#allocation6 + $0x28] sm:$0xf]
    %v77 = vld [vmem:[#allocation6 + $0x2c] sm:$0xf]
    %v78 = vld [vmem:[#allocation6 + $0x30] sm:$0xf]
    %v79 = vld [vmem:[#allocation6 + $0x34] sm:$0xf]
    %v80 = vld [vmem:[#allocation6 + $0x38] sm:$0xf]
    %v81 = vld [vmem:[#allocation6 + $0x3c] sm:$0xf]
    %v98 = vunpack.c.l.b16 %v66
    %v99 = vunpack.c.l.b16 %v67
    %v100 = vunpack.c.l.b16 %v68
    %v101 = vunpack.c.l.b16 %v69
    %v102 = vunpack.c.l.b16 %v70
    %v103 = vunpack.c.l.b16 %v71
    %v104 = vunpack.c.l.b16 %v72
    %v105 = vunpack.c.l.b16 %v73
    %v106 = vunpack.c.l.b16 %v74
    %v107 = vunpack.c.l.b16 %v75
    %v108 = vunpack.c.l.b16 %v76
    %v109 = vunpack.c.l.b16 %v77
    %v110 = vunpack.c.l.b16 %v78
    %v111 = vunpack.c.l.b16 %v79
    %v112 = vunpack.c.l.b16 %v80
    %v113 = vunpack.c.l.b16 %v81
    %v114 = vpack.c.b16 %v99, %v98
    %v115 = vpack.c.b16 %v101, %v100
    %v116 = vpack.c.b16 %v103, %v102
    %v117 = vpack.c.b16 %v105, %v104
    %v118 = vpack.c.b16 %v107, %v106
    %v119 = vpack.c.b16 %v109, %v108
    %v120 = vpack.c.b16 %v111, %v110
    %v121 = vpack.c.b16 %v113, %v112
    %130 = vmatprep.subr.bf16.mxu0 0
    %131 = vmatpush1.bf16.msra.mxu0 %v114
    %132 = vmatprep.subr.bf16.mxu0 0
    %133 = vmatpush1.bf16.msra.mxu0 %v115
    %134 = vmatprep.subr.bf16.mxu0 0
    %135 = vmatpush1.bf16.msra.mxu0 %v116
    %136 = vmatprep.subr.bf16.mxu0 0
    %137 = vmatpush1.bf16.msra.mxu0 %v117
    %138 = vmatprep.subr.bf16.mxu0 0
    %139 = vmatpush1.bf16.msra.mxu0 %v118
    %140 = vmatprep.subr.bf16.mxu0 0
    %141 = vmatpush1.bf16.msra.mxu0 %v119
    %142 = vmatprep.subr.bf16.mxu0 0
    %143 = vmatpush1.bf16.msra.mxu0 %v120
    %144 = vmatprep.subr.bf16.mxu0 0
    %145 = vmatpush1.bf16.msra.mxu0 %v121
    %146 = vmatprep.subr.bf16.mxu0 0
    %147 = vmatpush1.bf16.msra.mxu0 0
    %148 = vmatprep.subr.bf16.mxu0 0
    %149 = vmatpush1.bf16.msra.mxu0 0
    %150 = vmatprep.subr.bf16.mxu0 0
    %151 = vmatpush1.bf16.msra.mxu0 0
    %152 = vmatprep.subr.bf16.mxu0 0
    %153 = vmatpush1.bf16.msra.mxu0 0
    %154 = vmatprep.subr.bf16.mxu0 0
    %155 = vmatpush1.bf16.msra.mxu0 0
    %156 = vmatprep.subr.bf16.mxu0 0
    %157 = vmatpush1.bf16.msra.mxu0 0
    %158 = vmatprep.subr.bf16.mxu0 0
    %159 = vmatpush1.bf16.msra.mxu0 0
    %160 = vmatprep.subr.bf16.mxu0 0
    %161 = vmatpush1.bf16.msra.mxu0 0
    %162 = vmatprep.mubr.bf16.mxu0 0
    %163 = vmatmul.mubr.bf16.gmra.mrb[0].mxu0 %v63
    %v164 = vpop.f32.mrb[0].mxu0
    %v165 = vadd.f32 0.0, %v164
    %v166 = vpop.f32.mrb[0].mxu0
    %v167 = vpop.f32.mrb[0].mxu0
    %v168 = vadd.f32 0.0, %v167
    %v169 = vpop.f32.mrb[0].mxu0
    %170 = vdwg.mxu0
    %v171 = vadd.f32 %v64, %v165
    %v172 = vadd.f32 %v65, %v168
    %173 = vst [vmem:[#allocation2] sm:$0xff] %v171
    %174 = vst [vmem:[#allocation2 + $0x8] sm:$0xff] %v172
    // Predicated region
    $region30: #{tpu_custom_call.1} parent=1 // pred_check
      %p175 = pneg %p55
    $region31: #{tpu_custom_call.1} parent=1 // pred_check_branch
      %177 = sbr.rel (%p175) target = $region33
    $region32: #{tpu_custom_call.1} parent=1 // pred_region
      %v178 = vld [vmem:[#allocation2] sm:$0xff]
      %v179 = vld [vmem:[#allocation2 + $0x8] sm:$0xff]
      %v180 = vld [vmem:[#allocation8] sm:$0x1]
      %v182 = vlaneseq
      %v183 = vshrl.u32 %v182, 7
      %v184 = vsub.s32 0, %v183
      %v185 = vrot.slane %v180, %v184
      %v187 = vadd.f32 %v178, %v185
      %v188 = vadd.f32 %v179, %v185
      %v189 = vpack.c.bf16 %v188, %v187
      %v191 = vunpack.c.l.b16 %v189
      %v192 = vunpack.c.h.b16 %v189
      %v193 = vpack.c.b16 %v191, %v191
      %v194 = vpack.c.b16 %v192, %v192
      %197 = vst [vmem:[#allocation9] sm:$0xf] %v193
      %198 = vst [vmem:[#allocation9 + $0x4] sm:$0xf] %v194
    $region33: #{tpu_custom_call.1} parent=1 // pred_fallthru
      _
    // Predicated region
    $region34: #{tpu_custom_call.1} parent=1 // pred_check
      _
    $region35: #{tpu_custom_call.1} parent=1 // pred_check_branch
      %200 = sbr.rel (0) target = $region37
    $region36: #{tpu_custom_call.1} parent=1 // pred_region
      %s202 = ssub.s32 128, 128
      %203 = vsyncadd [#allocation5], %s202
      %s204 = sshll.u32 [#allocation9], 4
      %s205 = int_to_ptr.vmem [resolvable:$true] %s204
      %210 = dma.vmem_to_hbm [thread:$0]  %s205, 128, %s3, [#allocation5], 64, 64, 4
    $region37: #{tpu_custom_call.1} parent=1 // pred_fallthru
      _
    // Predicated region
    $region38: #{tpu_custom_call.1} parent=1 // pred_check
      _
    $region39: #{tpu_custom_call.1} parent=1 // pred_check_branch
      %212 = sbr.rel (0) target = $region41
    $region40: #{tpu_custom_call.1} parent=1 // pred_region
      %213 = dma.done [#allocation5], 128
    $region41: #{tpu_custom_call.1} parent=1 // pred_fallthru
      _
    %214 = vsyncpa [#allocation4], 1
    %215 = vsyncpa [#allocation7], 1
    %216 = vsyncpa [#allocation5], 1

</llo_original>
